<compile_context>
chip_gen: v7x
topology: tpu7x:2x2x1
jax: 0.10.0
libtpu: 0.0.40
codegen_flags: <defaults>
</compile_context>

<pallas_src>
import functools

import jax
import jax.numpy as jnp
from jax import lax
from jax.experimental import pallas as pl
from jax.experimental.pallas import tpu as pltpu

EPS = 1e-6
_PAD_FAR = 1e30      # pad coordinate "at infinity"
_LANE = 128          # TPU lane width / chunk size
_SUB = 16            # trajectory points per inner sub-tile (sublanes)
_MTILE_MAX = 256     # max trajectory points per grid step


def _round_up(x, m):
    return (x + m - 1) // m * m


def _offroad_kernel(p_ref, b_ref, c_ref, out_ref, *, threshold, sub, n_sub,
                    n_qchunks, n_echunks):
    # p_ref  : (MTILE, 2)                trajectory points (x, y)
    # b_ref  : (n_echunks, 5, 128)       edge planes [x0, y0, ex, ey, inv_esq]
    # c_ref  : (n_qchunks, 2, 128)       centerline point planes [cx, cy]
    # out_ref: (MTILE, 1)                per-point hinge loss
    lane_iota = lax.broadcasted_iota(jnp.int32, (sub, _LANE), 1).astype(jnp.float32)
    f32 = jnp.float32

    @pl.loop(0, n_sub)
    def _(t):
        start = pl.multiple_of(t * sub, sub)
        pts = p_ref[pl.ds(start, sub), :]           # (sub, 2)
        px = pts[:, 0:1]                            # (sub, 1)
        py = pts[:, 1:2]

        # ---- nearest centerline point: first flat argmin (== torch.min) ----
        def cl_body(q, carry):
            best_d, best_x, best_y = carry          # (sub, 1) each
            rows = c_ref[q]                         # (2, 128)
            cx = rows[0:1, :]                       # (1, 128)
            cy = rows[1:2, :]
            dx = px - cx                            # (sub, 128)
            dy = py - cy
            d = dx * dx + dy * dy
            dmin = jnp.min(d, axis=1, keepdims=True)
            first = jnp.min(jnp.where(d == dmin, lane_iota, float(_LANE)),
                            axis=1, keepdims=True)
            sel = lane_iota == first                # one-hot: first min lane
            sx = jnp.sum(jnp.where(sel, cx, 0.0), axis=1, keepdims=True)
            sy = jnp.sum(jnp.where(sel, cy, 0.0), axis=1, keepdims=True)
            upd = dmin < best_d                     # strict: earlier chunk wins ties
            return (jnp.where(upd, dmin, best_d),
                    jnp.where(upd, sx, best_x),
                    jnp.where(upd, sy, best_y))

        init_c = (jnp.full((sub, 1), jnp.inf, f32),
                  jnp.zeros((sub, 1), f32),
                  jnp.zeros((sub, 1), f32))
        _, ccx, ccy = lax.fori_loop(0, n_qchunks, cl_body, init_c,
                                    unroll=True if n_qchunks <= 4 else 2)
        dax = ccx - px                              # segment point -> nearest centerline
        day = ccy - py

        # ---- boundary: running min distance + intersection over edge chunks ----
        def b_body(e, carry):
            run_min, run_hit = carry                # (sub, 128) each
            rows = b_ref[e]                         # (5, 128)
            x0 = rows[0:1, :]
            y0 = rows[1:2, :]
            exv = rows[2:3, :]
            eyv = rows[3:4, :]
            inv = rows[4:5, :]
            v1x = px - x0                           # (sub, 128)
            v1y = py - y0
            proj = jnp.clip((v1x * exv + v1y * eyv) * inv, 0.0, 1.0)
            ddx = v1x - exv * proj
            ddy = v1y - eyv * proj
            run_min = jnp.minimum(run_min, ddx * ddx + ddy * ddy)
            # Division-free equivalent of t = dap/(dadb+eps), u = ddp/(dadb+eps),
            # (t in [0,1]) & (u in [0,1]).
            dap = dax * v1y - day * v1x
            ddp = exv * v1y - eyv * v1x
            den = dax * eyv - day * exv + EPS
            aden = jnp.abs(den)
            inter = ((dap * den >= 0.0) & (jnp.abs(dap) <= aden) &
                     (ddp * den >= 0.0) & (jnp.abs(ddp) <= aden))
            run_hit = jnp.where(inter, 1.0, run_hit)
            return run_min, run_hit

        init_b = (jnp.full((sub, _LANE), jnp.inf, f32),
                  jnp.zeros((sub, _LANE), f32))
        run_min, run_hit = lax.fori_loop(0, n_echunks, b_body, init_b,
                                         unroll=True if n_echunks <= 4 else 2)

        min_dist = jnp.sqrt(jnp.min(run_min, axis=1, keepdims=True))   # (sub, 1)
        hit = jnp.max(run_hit, axis=1, keepdims=True)
        signed = jnp.where(hit > 0.0, min_dist, -min_dist)
        out_ref[pl.ds(start, sub), :] = jnp.maximum(signed + threshold, 0.0)


def offroad_loss_centerlines(points, road_boundary, centerlines, threshold=0.5):
    points = points.astype(jnp.float32)
    rb = road_boundary.astype(jnp.float32)
    cl = centerlines.astype(jnp.float32)

    B, C, T, _ = points.shape
    _, K, N, _ = rb.shape
    _, S, P, _ = cl.shape
    M = C * T
    E = K * (N - 1)
    Q = S * P

    mtile = min(_MTILE_MAX, _round_up(M, _SUB))
    m_pad = _round_up(M, mtile)
    n_sub = mtile // _SUB

    e_pad = _round_up(E, _LANE)
    n_echunks = e_pad // _LANE
    q_pad = _round_up(Q, _LANE)
    n_qchunks = q_pad // _LANE

    # ---- trajectory points: (B, m_pad, 2), zero-padded on the point axis ----
    pts = points.reshape(B, M, 2)
    if m_pad > M:
        pts = jnp.concatenate(
            [pts, jnp.zeros((B, m_pad - M, 2), jnp.float32)], axis=1)

    # ---- flattened edge planes: (B, n_echunks, 5, 128) ----
    p0 = rb[:, :, :-1, :].reshape(B, E, 2)
    ev = (rb[:, :, 1:, :] - rb[:, :, :-1, :]).reshape(B, E, 2)
    inv = 1.0 / (ev[..., 0] * ev[..., 0] + ev[..., 1] * ev[..., 1] + EPS)
    planes = jnp.stack(
        [p0[..., 0], p0[..., 1], ev[..., 0], ev[..., 1], inv], axis=1)  # (B,5,E)
    if e_pad > E:
        # Pad edges are a tiny vertical segment "at infinity": the point-edge
        # distance overflows to +inf (never the min) and |cross(db,dp)| can
        # never be <= |cross(da,db)+eps| for finite trajectories, so padded
        # edges never register intersections.
        pad_vals = jnp.array([_PAD_FAR, _PAD_FAR, 0.0, 1.0, 0.0], jnp.float32)
        pad_blk = jnp.broadcast_to(pad_vals.reshape(1, 5, 1), (B, 5, e_pad - E))
        planes = jnp.concatenate([planes, pad_blk], axis=2)
    bnd = planes.reshape(B, 5, n_echunks, _LANE).transpose(0, 2, 1, 3)

    # ---- flattened centerline points: (B, n_qchunks, 2, 128) ----
    clq = cl.reshape(B, Q, 2)
    if q_pad > Q:
        clq = jnp.concatenate(
            [clq, jnp.full((B, q_pad - Q, 2), _PAD_FAR, jnp.float32)], axis=1)
    ctr = (clq.transpose(0, 2, 1)
           .reshape(B, 2, n_qchunks, _LANE)
           .transpose(0, 2, 1, 3))

    # VMEM limit derived from the double-buffered, (8,128)-padded block sizes.
    block_bytes = (mtile * _LANE * 4            # points block (mtile, 2)
                   + mtile * _LANE * 4          # output block (mtile, 1)
                   + n_echunks * 8 * _LANE * 4  # boundary planes
                   + n_qchunks * 8 * _LANE * 4)  # centerline planes
    vmem_limit = int(min(max(4 * block_bytes + (8 << 20), 16 << 20), 48 << 20))

    kernel = functools.partial(
        _offroad_kernel, threshold=float(threshold), sub=_SUB, n_sub=n_sub,
        n_qchunks=n_qchunks, n_echunks=n_echunks)

    per_point = pl.pallas_call(
        kernel,
        out_shape=jax.ShapeDtypeStruct((B, m_pad, 1), jnp.float32),
        grid_spec=pltpu.PrefetchScalarGridSpec(
            num_scalar_prefetch=0,
            grid=(B, m_pad // mtile),
            in_specs=[
                pl.BlockSpec((None, mtile, 2), lambda b, m: (b, m, 0)),
                pl.BlockSpec((None, n_echunks, 5, _LANE),
                             lambda b, m: (b, 0, 0, 0)),
                pl.BlockSpec((None, n_qchunks, 2, _LANE),
                             lambda b, m: (b, 0, 0, 0)),
            ],
            out_specs=pl.BlockSpec((None, mtile, 1), lambda b, m: (b, m, 0)),
        ),
        compiler_params=pltpu.CompilerParams(
            dimension_semantics=("parallel", "parallel"),
            vmem_limit_bytes=vmem_limit),
    )(pts, bnd, ctr)

    # Tiny epilogue: drop point padding, sum the per-timestep losses per mode.
    return per_point[:, :M, 0].reshape(B, C, T).sum(axis=-1)


def _reference_jax(points, road_boundary, centerlines, threshold=0.5):
    """Pure-JAX transcription of the PyTorch forward for verification."""
    eps = 1e-6
    B, C, T, _ = points.shape
    _, K, N, _ = road_boundary.shape
    _, S, P, _ = centerlines.shape

    rb = road_boundary[:, :, None, None, :, :]        # (B,K,1,1,N,2)
    pts = points[:, None, :, :, None, :]              # (B,1,C,T,1,2)
    v1 = pts - rb[..., :-1, :]
    ev = rb[..., 1:, :] - rb[..., :-1, :]
    dot = jnp.sum(v1 * ev, axis=-1)
    esq = jnp.sum(ev * ev, axis=-1)
    proj = jnp.clip(dot / (esq + eps), 0.0, 1.0)
    closest = ev * proj[..., None] + rb[..., :-1, :]
    dist_sq = jnp.sum((pts - closest) ** 2, axis=-1)
    min_dist = jnp.min(jnp.sqrt(dist_sq), axis=-1)
    min_dist = jnp.min(min_dist, axis=1)              # (B,C,T)

    cl = centerlines.reshape(B, S * P, 2)
    v2 = points[:, None] - cl[:, :, None, None, :]
    cdsq = jnp.sum(v2 ** 2, axis=-1)                  # (B,SP,C,T)
    idx = jnp.argmin(cdsq, axis=1)                    # (B,C,T)
    cl_b = jnp.broadcast_to(cl[:, :, None, None, :], (B, S * P, C, T, 2))
    ccp = jnp.take_along_axis(
        cl_b, jnp.broadcast_to(idx[:, None, :, :, None], (B, 1, C, T, 2)),
        axis=1)[:, 0]                                 # (B,C,T,2)

    def cross(u, v):
        return u[..., 0] * v[..., 1] - u[..., 1] * v[..., 0]

    a1 = points[:, None, None]
    a2 = ccp[:, None, None]
    b1 = road_boundary[:, :, :-1][:, :, :, None, None, :]
    b2 = road_boundary[:, :, 1:][:, :, :, None, None, :]
    da, db, dp = a2 - a1, b2 - b1, a1 - b1
    dap, ddp, dadb = cross(da, dp), cross(db, dp), cross(da, db)
    t = dap / (dadb + eps)
    u = ddp / (dadb + eps)
    inter = (t >= 0) & (t <= 1) & (u >= 0) & (u <= 1)
    inside = jnp.logical_not(jnp.any(jnp.any(inter, axis=2), axis=1))
    md = jnp.where(inside, -min_dist, min_dist)
    md = jnp.maximum(md + threshold, 0.0)
    return jnp.sum(md, axis=-1)


if __name__ == "__main__":
    # Module has no learnable parameters; threshold is a fixed constant (0.5).
    B, C, T = 2, 4, 8
    K, N = 3, 6
    S, P = 4, 8

    key = jax.random.PRNGKey(0)
    k1, k2, k3 = jax.random.split(key, 3)
    points = jax.random.normal(k1, (B, C, T, 2), dtype=jnp.float32) * 2.0
    road_boundary = jax.random.normal(k2, (B, K, N, 2), dtype=jnp.float32) * 3.0
    centerlines = jax.random.normal(k3, (B, S, P, 2), dtype=jnp.float32) * 3.0

    out = jax.block_until_ready(
        offroad_loss_centerlines(points, road_boundary, centerlines, threshold=0.5))
    ref = jax.block_until_ready(
        _reference_jax(points, road_boundary, centerlines, threshold=0.5))

    assert out.shape == (B, C), out.shape
    assert jnp.allclose(out, ref, atol=1e-3, rtol=1e-3), (out, ref)

    print("KERNEL_OK")
</pallas_src>

<mosaic_0001>
module attributes {stable_mosaic.version = 11 : i64} {
  func.func @_offroad_kernel(%arg0: i32, %arg1: i32, %arg2: memref<1x32x2xf32, #tpu.memory_space<vmem>>, %arg3: memref<1x1x5x128xf32, #tpu.memory_space<vmem>>, %arg4: memref<1x1x2x128xf32, #tpu.memory_space<vmem>>, %arg5: memref<1x32x1xf32, #tpu.memory_space<vmem>>) attributes {dimension_semantics = [#tpu.dimension_semantics<parallel>, #tpu.dimension_semantics<parallel>], iteration_bounds = array<i64: 2, 1>, scalar_prefetch = 0 : i64, scratch_operands = 0 : i64, tpu.core_type = #tpu.core_type<tc>, window_params = [{transform_indices = @transform_0, window_bounds = array<i64: 1, 32, 2>}, {transform_indices = @transform_1, window_bounds = array<i64: 1, 1, 5, 128>}, {transform_indices = @transform_2, window_bounds = array<i64: 1, 1, 2, 128>}, {transform_indices = @transform_3, window_bounds = array<i64: 1, 32, 1>}]} {
    %0 = tpu.iota {dimensions = array<i32: 1>} : vector<16x128xi32>
    %1 = arith.sitofp %0 : vector<16x128xi32> to vector<16x128xf32>
    %c0_i32 = arith.constant 0 : i32
    %c2_i32 = arith.constant 2 : i32
    %2 = arith.addi %c0_i32, %c2_i32 : i32
    %c1_i32 = arith.constant 1 : i32
    scf.for %arg6 = %c0_i32 to %2 step %c1_i32  : i32 {
      %c1_i32_1 = arith.constant 1 : i32
      %3 = arith.muli %arg6, %c1_i32_1 : i32
      %c0_i32_2 = arith.constant 0 : i32
      %4 = arith.addi %c0_i32_2, %3 : i32
      %c16_i32 = arith.constant 16 : i32
      %5 = arith.muli %4, %c16_i32 : i32
      %6 = tpu.assume_multiple %5, 16 : i32
      %c0 = arith.constant 0 : index
      %7 = arith.index_cast %6 : i32 to index
      %c0_3 = arith.constant 0 : index
      %8 = vector.load %arg2[%c0, %7, %c0_3] : memref<1x32x2xf32, #tpu.memory_space<vmem>>, vector<1x16x2xf32>
      %9 = vector.shape_cast %8 : vector<1x16x2xf32> to vector<16x2xf32>
      %10 = vector.extract_strided_slice %9 {offsets = [0, 0], sizes = [16, 1], strides = [1, 1]} : vector<16x2xf32> to vector<16x1xf32>
      %11 = vector.extract_strided_slice %9 {offsets = [0, 1], sizes = [16, 1], strides = [1, 1]} : vector<16x2xf32> to vector<16x1xf32>
      %cst = arith.constant 0x7F800000 : f32
      %12 = vector.broadcast %cst : f32 to vector<16x1xf32>
      %cst_4 = arith.constant 0.000000e+00 : f32
      %13 = vector.broadcast %cst_4 : f32 to vector<16x1xf32>
      %cst_5 = arith.constant 0.000000e+00 : f32
      %14 = vector.broadcast %cst_5 : f32 to vector<16x1xf32>
      %c0_i32_6 = arith.constant 0 : i32
      %c0_7 = arith.constant 0 : index
      %15 = arith.index_cast %c0_i32_6 : i32 to index
      %c0_8 = arith.constant 0 : index
      %c0_9 = arith.constant 0 : index
      %16 = vector.load %arg4[%c0_7, %15, %c0_8, %c0_9] : memref<1x1x2x128xf32, #tpu.memory_space<vmem>>, vector<1x1x2x128xf32>
      %17 = vector.shape_cast %16 : vector<1x1x2x128xf32> to vector<2x128xf32>
      %18 = vector.extract_strided_slice %17 {offsets = [0, 0], sizes = [1, 128], strides = [1, 1]} : vector<2x128xf32> to vector<1x128xf32>
      %19 = vector.extract_strided_slice %17 {offsets = [1, 0], sizes = [1, 128], strides = [1, 1]} : vector<2x128xf32> to vector<1x128xf32>
      %20 = vector.broadcast %10 : vector<16x1xf32> to vector<16x128xf32>
      %21 = vector.broadcast %18 : vector<1x128xf32> to vector<16x128xf32>
      %22 = arith.subf %20, %21 : vector<16x128xf32>
      %23 = vector.broadcast %11 : vector<16x1xf32> to vector<16x128xf32>
      %24 = vector.broadcast %19 : vector<1x128xf32> to vector<16x128xf32>
      %25 = arith.subf %23, %24 : vector<16x128xf32>
      %26 = arith.mulf %22, %22 : vector<16x128xf32>
      %27 = arith.mulf %25, %25 : vector<16x128xf32>
      %28 = arith.addf %26, %27 : vector<16x128xf32>
      %cst_10 = arith.constant dense<0x7F800000> : vector<16xf32>
      %29 = vector.multi_reduction <minimumf>, %28, %cst_10 [1] : vector<16x128xf32> to vector<16xf32>
      %30 = vector.shape_cast %29 : vector<16xf32> to vector<16x1xf32>
      %31 = vector.broadcast %30 : vector<16x1xf32> to vector<16x128xf32>
      %32 = arith.cmpf oeq, %28, %31 : vector<16x128xf32>
      %cst_11 = arith.constant 1.280000e+02 : f32
      %33 = vector.broadcast %cst_11 : f32 to vector<16x128xf32>
      %34 = arith.select %32, %1, %33 : vector<16x128xi1>, vector<16x128xf32>
      %cst_12 = arith.constant dense<0x7F800000> : vector<16xf32>
      %35 = vector.multi_reduction <minimumf>, %34, %cst_12 [1] : vector<16x128xf32> to vector<16xf32>
      %36 = vector.shape_cast %35 : vector<16xf32> to vector<16x1xf32>
      %37 = vector.broadcast %36 : vector<16x1xf32> to vector<16x128xf32>
      %38 = arith.cmpf oeq, %1, %37 : vector<16x128xf32>
      %cst_13 = arith.constant 0.000000e+00 : f32
      %39 = vector.shape_cast %18 : vector<1x128xf32> to vector<1x128xf32>
      %40 = vector.broadcast %39 : vector<1x128xf32> to vector<16x128xf32>
      %41 = vector.broadcast %cst_13 : f32 to vector<16x128xf32>
      %42 = arith.select %38, %40, %41 : vector<16x128xi1>, vector<16x128xf32>
      %cst_14 = arith.constant dense<0.000000e+00> : vector<16xf32>
      %43 = vector.multi_reduction <add>, %42, %cst_14 [1] : vector<16x128xf32> to vector<16xf32>
      %44 = vector.shape_cast %43 : vector<16xf32> to vector<16x1xf32>
      %cst_15 = arith.constant 0.000000e+00 : f32
      %45 = vector.shape_cast %19 : vector<1x128xf32> to vector<1x128xf32>
      %46 = vector.broadcast %45 : vector<1x128xf32> to vector<16x128xf32>
      %47 = vector.broadcast %cst_15 : f32 to vector<16x128xf32>
      %48 = arith.select %38, %46, %47 : vector<16x128xi1>, vector<16x128xf32>
      %cst_16 = arith.constant dense<0.000000e+00> : vector<16xf32>
      %49 = vector.multi_reduction <add>, %48, %cst_16 [1] : vector<16x128xf32> to vector<16xf32>
      %50 = vector.shape_cast %49 : vector<16xf32> to vector<16x1xf32>
      %51 = arith.cmpf olt, %30, %12 : vector<16x1xf32>
      %52 = arith.select %51, %30, %12 : vector<16x1xi1>, vector<16x1xf32>
      %53 = arith.select %51, %44, %13 : vector<16x1xi1>, vector<16x1xf32>
      %54 = arith.select %51, %50, %14 : vector<16x1xi1>, vector<16x1xf32>
      %c1_i32_17 = arith.constant 1 : i32
      %55 = arith.subf %53, %10 : vector<16x1xf32>
      %56 = arith.subf %54, %11 : vector<16x1xf32>
      %cst_18 = arith.constant 0x7F800000 : f32
      %57 = vector.broadcast %cst_18 : f32 to vector<16x128xf32>
      %cst_19 = arith.constant 0.000000e+00 : f32
      %58 = vector.broadcast %cst_19 : f32 to vector<16x128xf32>
      %c0_i32_20 = arith.constant 0 : i32
      %c0_21 = arith.constant 0 : index
      %59 = arith.index_cast %c0_i32_20 : i32 to index
      %c0_22 = arith.constant 0 : index
      %c0_23 = arith.constant 0 : index
      %60 = vector.load %arg3[%c0_21, %59, %c0_22, %c0_23] : memref<1x1x5x128xf32, #tpu.memory_space<vmem>>, vector<1x1x5x128xf32>
      %61 = vector.shape_cast %60 : vector<1x1x5x128xf32> to vector<5x128xf32>
      %62 = vector.extract_strided_slice %61 {offsets = [0, 0], sizes = [1, 128], strides = [1, 1]} : vector<5x128xf32> to vector<1x128xf32>
      %63 = vector.extract_strided_slice %61 {offsets = [1, 0], sizes = [1, 128], strides = [1, 1]} : vector<5x128xf32> to vector<1x128xf32>
      %64 = vector.extract_strided_slice %61 {offsets = [2, 0], sizes = [1, 128], strides = [1, 1]} : vector<5x128xf32> to vector<1x128xf32>
      %65 = vector.extract_strided_slice %61 {offsets = [3, 0], sizes = [1, 128], strides = [1, 1]} : vector<5x128xf32> to vector<1x128xf32>
      %66 = vector.extract_strided_slice %61 {offsets = [4, 0], sizes = [1, 128], strides = [1, 1]} : vector<5x128xf32> to vector<1x128xf32>
      %67 = vector.broadcast %10 : vector<16x1xf32> to vector<16x128xf32>
      %68 = vector.broadcast %62 : vector<1x128xf32> to vector<16x128xf32>
      %69 = arith.subf %67, %68 : vector<16x128xf32>
      %70 = vector.broadcast %11 : vector<16x1xf32> to vector<16x128xf32>
      %71 = vector.broadcast %63 : vector<1x128xf32> to vector<16x128xf32>
      %72 = arith.subf %70, %71 : vector<16x128xf32>
      %73 = vector.broadcast %64 : vector<1x128xf32> to vector<16x128xf32>
      %74 = arith.mulf %69, %73 : vector<16x128xf32>
      %75 = vector.broadcast %65 : vector<1x128xf32> to vector<16x128xf32>
      %76 = arith.mulf %72, %75 : vector<16x128xf32>
      %77 = arith.addf %74, %76 : vector<16x128xf32>
      %78 = vector.broadcast %66 : vector<1x128xf32> to vector<16x128xf32>
      %79 = arith.mulf %77, %78 : vector<16x128xf32>
      %cst_24 = arith.constant 0.000000e+00 : f32
      %cst_25 = arith.constant 1.000000e+00 : f32
      %80 = vector.broadcast %cst_24 : f32 to vector<16x128xf32>
      %81 = arith.maximumf %80, %79 : vector<16x128xf32>
      %82 = vector.broadcast %cst_25 : f32 to vector<16x128xf32>
      %83 = arith.minimumf %82, %81 : vector<16x128xf32>
      %84 = vector.broadcast %64 : vector<1x128xf32> to vector<16x128xf32>
      %85 = arith.mulf %84, %83 : vector<16x128xf32>
      %86 = arith.subf %69, %85 : vector<16x128xf32>
      %87 = vector.broadcast %65 : vector<1x128xf32> to vector<16x128xf32>
      %88 = arith.mulf %87, %83 : vector<16x128xf32>
      %89 = arith.subf %72, %88 : vector<16x128xf32>
      %90 = arith.mulf %86, %86 : vector<16x128xf32>
      %91 = arith.mulf %89, %89 : vector<16x128xf32>
      %92 = arith.addf %90, %91 : vector<16x128xf32>
      %93 = arith.minimumf %57, %92 : vector<16x128xf32>
      %94 = vector.broadcast %55 : vector<16x1xf32> to vector<16x128xf32>
      %95 = arith.mulf %94, %72 : vector<16x128xf32>
      %96 = vector.broadcast %56 : vector<16x1xf32> to vector<16x128xf32>
      %97 = arith.mulf %96, %69 : vector<16x128xf32>
      %98 = arith.subf %95, %97 : vector<16x128xf32>
      %99 = vector.broadcast %64 : vector<1x128xf32> to vector<16x128xf32>
      %100 = arith.mulf %99, %72 : vector<16x128xf32>
      %101 = vector.broadcast %65 : vector<1x128xf32> to vector<16x128xf32>
      %102 = arith.mulf %101, %69 : vector<16x128xf32>
      %103 = arith.subf %100, %102 : vector<16x128xf32>
      %104 = vector.broadcast %55 : vector<16x1xf32> to vector<16x128xf32>
      %105 = vector.broadcast %65 : vector<1x128xf32> to vector<16x128xf32>
      %106 = arith.mulf %104, %105 : vector<16x128xf32>
      %107 = vector.broadcast %56 : vector<16x1xf32> to vector<16x128xf32>
      %108 = vector.broadcast %64 : vector<1x128xf32> to vector<16x128xf32>
      %109 = arith.mulf %107, %108 : vector<16x128xf32>
      %110 = arith.subf %106, %109 : vector<16x128xf32>
      %cst_26 = arith.constant 9.99999997E-7 : f32
      %111 = vector.broadcast %cst_26 : f32 to vector<16x128xf32>
      %112 = arith.addf %110, %111 : vector<16x128xf32>
      %113 = math.absf %112 : vector<16x128xf32>
      %114 = arith.mulf %98, %112 : vector<16x128xf32>
      %cst_27 = arith.constant 0.000000e+00 : f32
      %115 = vector.broadcast %cst_27 : f32 to vector<16x128xf32>
      %116 = arith.cmpf oge, %114, %115 : vector<16x128xf32>
      %117 = math.absf %98 : vector<16x128xf32>
      %118 = arith.cmpf ole, %117, %113 : vector<16x128xf32>
      %119 = arith.andi %116, %118 : vector<16x128xi1>
      %120 = arith.mulf %103, %112 : vector<16x128xf32>
      %cst_28 = arith.constant 0.000000e+00 : f32
      %121 = vector.broadcast %cst_28 : f32 to vector<16x128xf32>
      %122 = arith.cmpf oge, %120, %121 : vector<16x128xf32>
      %123 = arith.andi %119, %122 : vector<16x128xi1>
      %124 = math.absf %103 : vector<16x128xf32>
      %125 = arith.cmpf ole, %124, %113 : vector<16x128xf32>
      %126 = arith.andi %123, %125 : vector<16x128xi1>
      %cst_29 = arith.constant 1.000000e+00 : f32
      %127 = vector.broadcast %cst_29 : f32 to vector<16x128xf32>
      %128 = arith.select %126, %127, %58 : vector<16x128xi1>, vector<16x128xf32>
      %c1_i32_30 = arith.constant 1 : i32
      %cst_31 = arith.constant dense<0x7F800000> : vector<16xf32>
      %129 = vector.multi_reduction <minimumf>, %93, %cst_31 [1] : vector<16x128xf32> to vector<16xf32>
      %130 = vector.shape_cast %129 : vector<16xf32> to vector<16x1xf32>
      %131 = math.sqrt %130 : vector<16x1xf32>
      %cst_32 = arith.constant dense<0xFF800000> : vector<16xf32>
      %132 = vector.multi_reduction <maximumf>, %128, %cst_32 [1] : vector<16x128xf32> to vector<16xf32>
      %133 = vector.shape_cast %132 : vector<16xf32> to vector<16x1xf32>
      %cst_33 = arith.constant 0.000000e+00 : f32
      %134 = vector.broadcast %cst_33 : f32 to vector<16x1xf32>
      %135 = arith.cmpf ogt, %133, %134 : vector<16x1xf32>
      %cst_34 = arith.constant 0.000000e+00 : f32
      %136 = vector.broadcast %cst_34 : f32 to vector<16x1xf32>
      %137 = arith.subf %136, %131 : vector<16x1xf32>
      %138 = arith.select %135, %131, %137 : vector<16x1xi1>, vector<16x1xf32>
      %cst_35 = arith.constant 5.000000e-01 : f32
      %139 = vector.broadcast %cst_35 : f32 to vector<16x1xf32>
      %140 = arith.addf %138, %139 : vector<16x1xf32>
      %cst_36 = arith.constant 0.000000e+00 : f32
      %141 = vector.broadcast %cst_36 : f32 to vector<16x1xf32>
      %142 = arith.maximumf %140, %141 : vector<16x1xf32>
      %c0_37 = arith.constant 0 : index
      %143 = arith.index_cast %6 : i32 to index
      %c0_38 = arith.constant 0 : index
      %144 = vector.load %arg5[%c0_37, %143, %c0_38] : memref<1x32x1xf32, #tpu.memory_space<vmem>>, vector<1x16x1xf32>
      %145 = vector.shape_cast %144 : vector<1x16x1xf32> to vector<16x1xf32>
      %146 = vector.shape_cast %142 : vector<16x1xf32> to vector<1x16x1xf32>
      tpu.vector_store %arg5[%c0_37, %143, %c0_38], %146 {strides = array<i32>} : memref<1x32x1xf32, #tpu.memory_space<vmem>>, vector<1x16x1xf32>,
    }
    %c2_i32_0 = arith.constant 2 : i32
    return
  }
  func.func @transform_0(%arg0: i32, %arg1: i32) -> (i32, i32, i32) {
    %c0_i32 = arith.constant 0 : i32
    %c0_i32_0 = arith.constant 0 : i32
    return %arg0, %arg1, %c0_i32 : i32, i32, i32
  }
  func.func @transform_1(%arg0: i32, %arg1: i32) -> (i32, i32, i32, i32) {
    %c0_i32 = arith.constant 0 : i32
    %c0_i32_0 = arith.constant 0 : i32
    %c0_i32_1 = arith.constant 0 : i32
    %c0_i32_2 = arith.constant 0 : i32
    return %arg0, %c0_i32, %c0_i32_0, %c0_i32_1 : i32, i32, i32, i32
  }
  func.func @transform_2(%arg0: i32, %arg1: i32) -> (i32, i32, i32, i32) {
    %c0_i32 = arith.constant 0 : i32
    %c0_i32_0 = arith.constant 0 : i32
    %c0_i32_1 = arith.constant 0 : i32
    %c0_i32_2 = arith.constant 0 : i32
    return %arg0, %c0_i32, %c0_i32_0, %c0_i32_1 : i32, i32, i32, i32
  }
  func.func @transform_3(%arg0: i32, %arg1: i32) -> (i32, i32, i32) {
    %c0_i32 = arith.constant 0 : i32
    %c0_i32_0 = arith.constant 0 : i32
    return %arg0, %arg1, %c0_i32 : i32, i32, i32
  }
}

</mosaic_0001>

<llo_original>
// kernel: tpu_custom_call.1
$region0: #{tpu_custom_call.1}
  #allocation0 [shape = 'u32[]', space=smem, size = 0x4, offset = 0x4, fixed_abs, tag = 'smem constant byte address 0x4 - core index']
  #allocation1 [shape = 'u32[144,128]{1,0:T(1,128)}', space=vmem, size = 0x12000, scoped, tag = 'internal scratch']
  %s0 = inlined_call_operand.vmem [shape: f32[2,32,2], index: 0, kind: input, shape index: {}]
  %s1 = inlined_call_operand.vmem [shape: f32[2,1,5,128], index: 1, kind: input, shape index: {}]
  %s2 = inlined_call_operand.vmem [shape: f32[2,1,2,128], index: 2, kind: input, shape index: {}]
  %s3 = inlined_call_operand.vmem [shape: f32[2,32,1], index: 3, kind: output, shape index: {}]
  %s4 = sld [smem:[#allocation0]]
  $region52: #{tpu_custom_call.1} parent=0
    _
  %s6 = ssub.s32 1, %s4
  %s7 = scalar_select 0, %s6, %s4
  loop: start=0, step=1, limit=4
  $region2: #{tpu_custom_call.1} parent=0 // loop_pre_header
    _
  $region3: #{tpu_custom_call.1} parent=0 // loop_header
    %s9 = sphi 0, %s13
    %p10 = scmp.ge.s32.totalorder %s9, 4
    %s16 = sphi 0, %s28
    %s17 = sphi 0, %s24
    %s18 = sphi 0, %s16
    %s19 = sphi 0, %s17
    %s20 = sphi 0, %s18
    %s21 = sphi 0, %s19
    %s33 = sphi 0, %s35
    %s36 = sphi 0, %s33
    %s37 = sphi 0, %s36
    %s53 = sphi 0, %s37
    %s59 = sphi 0, %s61
    %s62 = sphi 0, %s59
    %s63 = sphi 0, %s62
    %s79 = sphi 0, %s63
    %s85 = sphi 0, %s87
    %s88 = sphi 0, %s85
    %s89 = sphi 0, %s88
    %s105 = sphi 0, %s89
    %s113 = sphi 0, %s115
    %s116 = sphi 0, %s113
    %s117 = sphi 0, %s116
    %s133 = sphi 0, %s117
  $region4: #{tpu_custom_call.1} parent=0 // loop_header_branch
    %12 = sbr.rel (%p10) target = $region8
  $region5: #{tpu_custom_call.1} parent=0 // loop_body
    %s14 = ssub.s32 %s9, 1
    %s15 = ssub.s32 %s9, 2
    %s22 = sadd.s32 1, %s17
    %p23 = scmp.ge.s32.totalorder %s22, 1
    %s24 = scalar_select %p23, 0, %s22
    %s25 = sadd.s32 1, %s16
    %s26 = scalar_select %p23, %s25, %s16
    %p27 = scmp.ge.s32.totalorder %s26, 2
    %s28 = scalar_select %p27, 0, %s26
    %s29 = ssub.s32 %s16, %s28
    %s30 = ssub.s32 %s17, %s24
    %s31 = sor.u32 %s29, %s30
    %p32 = scmp.eq.s32.totalorder %s31, 0
    %s34 = sadd.s32 %s33, 1
    %s35 = scalar_select %p32, %s33, %s34
    %p38 = pneg %p32
    %p39 = scmp.eq.s32.totalorder %s9, 1
    %p40 = por %p38, %p39
    %p41 = scmp.ne.s32.totalorder %s33, %s36
    %p42 = scmp.eq.s32.totalorder %s9, 0
    %p43 = por %p41, %p42
    %p44 = scmp.ne.s32.totalorder %s33, %s36
    %p45 = scmp.eq.s32.totalorder %s14, 1
    %p46 = por %p44, %p45
    %p47 = scmp.ne.s32.totalorder %s36, %s37
    %p48 = scmp.eq.s32.totalorder %s14, 0
    %p49 = por %p47, %p48
    %p50 = scmp.ne.s32.totalorder %s36, %s37
    %p51 = scmp.eq.s32.totalorder %s15, 1
    %p52 = por %p50, %p51
    %p54 = scmp.ne.s32.totalorder %s37, %s53
    %p55 = scmp.eq.s32.totalorder %s15, 0
    %p56 = por %p54, %p55
    %s57 = ssub.s32 %s16, %s28
    %p58 = scmp.eq.s32.totalorder %s57, 0
    %s60 = sadd.s32 %s59, 1
    %s61 = scalar_select %p58, %s59, %s60
    %p64 = pneg %p58
    %p65 = scmp.eq.s32.totalorder %s9, 1
    %p66 = por %p64, %p65
    %p67 = scmp.ne.s32.totalorder %s59, %s62
    %p68 = scmp.eq.s32.totalorder %s9, 0
    %p69 = por %p67, %p68
    %p70 = scmp.ne.s32.totalorder %s59, %s62
    %p71 = scmp.eq.s32.totalorder %s14, 1
    %p72 = por %p70, %p71
    %p73 = scmp.ne.s32.totalorder %s62, %s63
    %p74 = scmp.eq.s32.totalorder %s14, 0
    %p75 = por %p73, %p74
    %p76 = scmp.ne.s32.totalorder %s62, %s63
    %p77 = scmp.eq.s32.totalorder %s15, 1
    %p78 = por %p76, %p77
    %p80 = scmp.ne.s32.totalorder %s63, %s79
    %p81 = scmp.eq.s32.totalorder %s15, 0
    %p82 = por %p80, %p81
    %s83 = ssub.s32 %s16, %s28
    %p84 = scmp.eq.s32.totalorder %s83, 0
    %s86 = sadd.s32 %s85, 1
    %s87 = scalar_select %p84, %s85, %s86
    %p90 = pneg %p84
    %p91 = scmp.eq.s32.totalorder %s9, 1
    %p92 = por %p90, %p91
    %p93 = scmp.ne.s32.totalorder %s85, %s88
    %p94 = scmp.eq.s32.totalorder %s9, 0
    %p95 = por %p93, %p94
    %p96 = scmp.ne.s32.totalorder %s85, %s88
    %p97 = scmp.eq.s32.totalorder %s14, 1
    %p98 = por %p96, %p97
    %p99 = scmp.ne.s32.totalorder %s88, %s89
    %p100 = scmp.eq.s32.totalorder %s14, 0
    %p101 = por %p99, %p100
    %p102 = scmp.ne.s32.totalorder %s88, %s89
    %p103 = scmp.eq.s32.totalorder %s15, 1
    %p104 = por %p102, %p103
    %p106 = scmp.ne.s32.totalorder %s89, %s105
    %p107 = scmp.eq.s32.totalorder %s15, 0
    %p108 = por %p106, %p107
    %s109 = ssub.s32 %s16, %s28
    %s110 = ssub.s32 %s17, %s24
    %s111 = sor.u32 %s109, %s110
    %p112 = scmp.eq.s32.totalorder %s111, 0
    %s114 = sadd.s32 %s113, 1
    %s115 = scalar_select %p112, %s113, %s114
    %p118 = pneg %p112
    %p119 = scmp.eq.s32.totalorder %s9, 1
    %p120 = por %p118, %p119
    %p121 = scmp.ne.s32.totalorder %s113, %s116
    %p122 = scmp.eq.s32.totalorder %s9, 0
    %p123 = por %p121, %p122
    %p124 = scmp.ne.s32.totalorder %s113, %s116
    %p125 = scmp.eq.s32.totalorder %s14, 1
    %p126 = por %p124, %p125
    %p127 = scmp.ne.s32.totalorder %s116, %s117
    %p128 = scmp.eq.s32.totalorder %s14, 0
    %p129 = por %p127, %p128
    %p130 = scmp.ne.s32.totalorder %s116, %s117
    %p131 = scmp.eq.s32.totalorder %s15, 1
    %p132 = por %p130, %p131
    %p134 = scmp.ne.s32.totalorder %s117, %s133
    %p135 = scmp.eq.s32.totalorder %s15, 0
    %p136 = por %p134, %p135
    %p137 = scmp.le.s32.totalorder 1, %s9
    %p138 = scmp.lt.s32.totalorder %s9, 3
    %p139 = pnand %p137, %p138
    %p140 = pneg %p139
    // Predicated region
    $region9: #{tpu_custom_call.1} parent=5 // pred_check
      _
    $region10: #{tpu_custom_call.1} parent=5 // pred_check_branch
      %142 = sbr.rel (%p139) target = $region12
    $region11: #{tpu_custom_call.1} parent=5 // pred_region
      %s143 = ssub.s32 %s9, 1
    $region12: #{tpu_custom_call.1} parent=5 // pred_fallthru
      _
    %p144 = scmp.lt.s32.totalorder %s9, 2
    // Predicated region
    $region13: #{tpu_custom_call.1} parent=5 // pred_check
      %p145 = pneg %p144
    $region14: #{tpu_custom_call.1} parent=5 // pred_check_branch
      %147 = sbr.rel (%p145) target = $region16
    $region15: #{tpu_custom_call.1} parent=5 // pred_region
      // Predicated region
      $region17: #{tpu_custom_call.1} parent=15 // pred_check
        %p148 = pneg %p43
      $region18: #{tpu_custom_call.1} parent=15 // pred_check_branch
        %150 = sbr.rel (%p148) target = $region20
      $region19: #{tpu_custom_call.1} parent=15 // pred_region
        %s151 = smul.u32 4, %s17
        %p152 = scmp.lt.s32.totalorder %s16, 1
        %s153 = scalar_select %p152, %s16, 1
        %p154 = scmp.lt.s32.totalorder %s151, 3
        %s155 = scalar_select %p154, %s151, 3
        %s156 = smul.addr %s153, 4
        %s157 = sadd.s32 %s155, %s156
        %s158 = smul.addr %s157, 8
        %s159 = scalar_lea.vmem %s0, %s158
        %s160 = smul.u32 4, %s17
      $region20: #{tpu_custom_call.1} parent=15 // pred_fallthru
        _
      // Predicated region
      $region21: #{tpu_custom_call.1} parent=15 // pred_check
        %p161 = pneg %p69
      $region22: #{tpu_custom_call.1} parent=15 // pred_check_branch
        %163 = sbr.rel (%p161) target = $region24
      $region23: #{tpu_custom_call.1} parent=15 // pred_region
        %p164 = scmp.lt.s32.totalorder %s16, 1
        %s165 = scalar_select %p164, %s16, 1
        %s166 = smul.addr %s165, 8
        %s167 = scalar_lea.vmem %s1, %s166
      $region24: #{tpu_custom_call.1} parent=15 // pred_fallthru
        _
      // Predicated region
      $region25: #{tpu_custom_call.1} parent=15 // pred_check
        %p168 = pneg %p95
      $region26: #{tpu_custom_call.1} parent=15 // pred_check_branch
        %170 = sbr.rel (%p168) target = $region28
      $region27: #{tpu_custom_call.1} parent=15 // pred_region
        %p171 = scmp.lt.s32.totalorder %s16, 1
        %s172 = scalar_select %p171, %s16, 1
        %s173 = smul.addr %s172, 2
        %s174 = scalar_lea.vmem %s2, %s173
      $region28: #{tpu_custom_call.1} parent=15 // pred_fallthru
        _
    $region16: #{tpu_custom_call.1} parent=5 // pred_fallthru
      _
    %p175 = scmp.le.s32.totalorder 1, %s9
    %p176 = scmp.lt.s32.totalorder %s9, 3
    %p177 = pnand %p175, %p176
    %p178 = pneg %p177
    // Predicated region
    $region29: #{tpu_custom_call.1} parent=5 // pred_check
      _
    $region30: #{tpu_custom_call.1} parent=5 // pred_check_branch
      %180 = sbr.rel (%p177) target = $region32
    $region31: #{tpu_custom_call.1} parent=5 // pred_region
      %s181 = ssub.s32 %s9, 1
      %s182 = smul.u32 4, %s19
      %p183 = scmp.lt.s32.totalorder %s18, 1
      %s184 = scalar_select %p183, %s18, 1
      %p185 = scmp.lt.s32.totalorder %s182, 3
      %s186 = scalar_select %p185, %s182, 3
      %s187 = smul.addr %s184, 4
      %s188 = sadd.s32 %s186, %s187
      %s189 = smul.addr %s188, 8
      %s190 = scalar_lea.vmem %s0, %s189
      %p191 = pneg %p49
      %p192 = pneg %p46
      %p193 = scmp.lt.s32.totalorder %s18, 1
      %s194 = scalar_select %p193, %s18, 1
      %s195 = smul.addr %s194, 8
      %s196 = scalar_lea.vmem %s1, %s195
      %p197 = pneg %p75
      %p198 = pneg %p72
      %p199 = scmp.lt.s32.totalorder %s18, 1
      %s200 = scalar_select %p199, %s18, 1
      %s201 = smul.addr %s200, 2
      %s202 = scalar_lea.vmem %s2, %s201
      %p203 = pneg %p101
      %p204 = pneg %p98
      %p205 = pneg %p129
      %p206 = pneg %p126
      %s207 = smul.u32 4, %s19
      %p208 = scmp.lt.s32.totalorder %s18, 1
      %s209 = scalar_select %p208, %s18, 1
      %p210 = scmp.lt.s32.totalorder %s207, 3
      %s211 = scalar_select %p210, %s207, 3
      %s212 = smul.addr %s209, 4
      %s213 = sadd.s32 %s211, %s212
      %s214 = smul.addr %s213, 8
      %s215 = scalar_lea.vmem %s3, %s214
      %s216 = smul.u32 4, %s19
      %p217 = scmp.lt.s32.totalorder %s18, 1
      %s218 = scalar_select %p217, %s18, 1
      %p219 = scmp.lt.s32.totalorder %s216, 3
      %s220 = scalar_select %p219, %s216, 3
      %s221 = smul.addr %s218, 4
      %s222 = sadd.s32 %s220, %s221
      %s223 = smul.addr %s222, 8
      %s224 = scalar_lea.vmem %s0, %s223
      %s225 = smul.u32 4, %s19
      %p226 = scmp.lt.s32.totalorder %s18, 1
      %s227 = scalar_select %p226, %s18, 1
      %s228 = smul.addr %s227, 8
      %s229 = scalar_lea.vmem %s1, %s228
      %p230 = scmp.lt.s32.totalorder %s18, 1
      %s231 = scalar_select %p230, %s18, 1
      %s232 = smul.addr %s231, 2
      %s233 = scalar_lea.vmem %s2, %s232
      %s234 = smul.u32 4, %s19
      %p235 = scmp.lt.s32.totalorder %s18, 1
      %s236 = scalar_select %p235, %s18, 1
      %p237 = scmp.lt.s32.totalorder %s234, 3
      %s238 = scalar_select %p237, %s234, 3
      %s239 = smul.addr %s236, 4
      %s240 = sadd.s32 %s238, %s239
      %s241 = smul.addr %s240, 8
      %s242 = scalar_lea.vmem %s3, %s241
      %s243 = smul.u32 4, %s19
      %v244 = vlaneseq
      %v245 = vand.u32 %v244, 127
      %v246 = vcvt.s32.f32 %v245
      loop: start=0, step=1, limit=2
      $region33: #{tpu_custom_call.1} parent=31 // loop_pre_header
        _
      $region34: #{tpu_custom_call.1} parent=31 // loop_header
        %s248 = sphi 0, %s252
        %p249 = scmp.ge.s32.totalorder %s248, 2
      $region35: #{tpu_custom_call.1} parent=31 // loop_header_branch
        %251 = sbr.rel (%p249) target = $region39
      $region36: #{tpu_custom_call.1} parent=31 // loop_body
        %s253 = smul.u32 %s248, 16
        %s254 = scalar_lea.vmem %s224, %s253
        %v255 = vld [vmem:[%s254] sm:$0xff]
        %v256 = vld [vmem:[%s254 + $0x8] sm:$0xff]
        %v257 = vld [vmem:[%s233] sm:$0x3]
        %259 = vset.pattern.permute.xlu0 0
        %260 = vperm.xlu0 %259, %v255
        %v261 = vpop.permute.xlu0 %260
        %264 = vset.pattern.permute.xlu0 0
        %265 = vperm.xlu0 %264, %v256
        %v266 = vpop.permute.xlu0 %265
        %v268 = vlaneseq
        %v269 = vshrl.u32 %v268, 7
        %v270 = vsub.s32 0, %v269
        %v271 = vrot.slane %v257, %v270
        %v272 = vsub.f32 %v261, %v271
        %v273 = vsub.f32 %v266, %v271
        %274 = vset.pattern.permute.xlu0 1
        %275 = vperm.xlu0 %274, %v255
        %v276 = vpop.permute.xlu0 %275
        %278 = vset.pattern.permute.xlu0 1
        %279 = vperm.xlu0 %278, %v256
        %v280 = vpop.permute.xlu0 %279
        %v282 = vlaneseq
        %v283 = vshrl.u32 %v282, 7
        %v284 = vsub.s32 1, %v283
        %v285 = vrot.slane %v257, %v284
        %v286 = vsub.f32 %v276, %v285
        %v287 = vsub.f32 %v280, %v285
        %v288 = vmul.f32 %v272, %v272
        %v289 = vmul.f32 %v273, %v273
        %v290 = vmul.f32 %v286, %v286
        %v291 = vmul.f32 %v287, %v287
        %v292 = vadd.f32 %v288, %v290
        %v293 = vadd.f32 %v289, %v291
        %294 = vmin.xlane.f32.xlu0 %v292
        %v295 = vpop.xlane.xlu0 %294
        %296 = vmin.xlane.f32.xlu0 %v293
        %v297 = vpop.xlane.xlu0 %296
        %vm298 = vcmp.eq.f32.partialorder %v292, %v295
        %vm299 = vcmp.eq.f32.partialorder %v293, %v297
        %v300 = vsel %vm298, %v246, 128.0
        %v301 = vsel %vm299, %v246, 128.0
        %302 = vmin.xlane.f32.xlu0 %v300
        %v303 = vpop.xlane.xlu0 %302
        %304 = vmin.xlane.f32.xlu0 %v301
        %v305 = vpop.xlane.xlu0 %304
        %vm306 = vcmp.eq.f32.partialorder %v246, %v303
        %vm307 = vcmp.eq.f32.partialorder %v246, %v305
        %v308 = vsel %vm306, %v271, 0.0
        %v309 = vsel %vm307, %v271, 0.0
        %310 = vadd.xlane.f32.xlu0 %v308
        %v311 = vpop.xlane.xlu0 %310
        %312 = vadd.xlane.f32.xlu0 %v309
        %v313 = vpop.xlane.xlu0 %312
        %v314 = vsel %vm306, %v285, 0.0
        %v315 = vsel %vm307, %v285, 0.0
        %316 = vadd.xlane.f32.xlu0 %v314
        %v317 = vpop.xlane.xlu0 %316
        %318 = vadd.xlane.f32.xlu0 %v315
        %v319 = vpop.xlane.xlu0 %318
        %vm320 = vcmp.lt.f32.partialorder %v295, inf
        %vm321 = vcmp.lt.f32.partialorder %v297, inf
        %v322 = vsel %vm320, %v311, 0.0
        %v323 = vsel %vm321, %v313, 0.0
        %v324 = vsel %vm320, %v317, 0.0
        %v325 = vsel %vm321, %v319, 0.0
        %v326 = vsub.f32 %v322, %v255
        %v327 = vsub.f32 %v323, %v256
        %v328 = vsub.f32 %v324, %v255
        %v329 = vsub.f32 %v325, %v256
        %v330 = vld [vmem:[%s229] sm:$0x1f]
        %v331 = vlaneseq
        %v332 = vshrl.u32 %v331, 7
        %v333 = vsub.s32 0, %v332
        %v334 = vrot.slane %v330, %v333
        %v335 = vsub.f32 %v261, %v334
        %v336 = vsub.f32 %v266, %v334
        %v337 = vlaneseq
        %v338 = vshrl.u32 %v337, 7
        %v339 = vsub.s32 1, %v338
        %v340 = vrot.slane %v330, %v339
        %v341 = vsub.f32 %v276, %v340
        %v342 = vsub.f32 %v280, %v340
        %v343 = vlaneseq
        %v344 = vshrl.u32 %v343, 7
        %v345 = vsub.s32 2, %v344
        %v346 = vrot.slane %v330, %v345
        %v347 = vmul.f32 %v335, %v346
        %v348 = vmul.f32 %v336, %v346
        %v349 = vlaneseq
        %v350 = vshrl.u32 %v349, 7
        %v351 = vsub.s32 3, %v350
        %v352 = vrot.slane %v330, %v351
        %v353 = vmul.f32 %v341, %v352
        %v354 = vmul.f32 %v342, %v352
        %v355 = vadd.f32 %v347, %v353
        %v356 = vadd.f32 %v348, %v354
        %v357 = vlaneseq
        %v358 = vshrl.u32 %v357, 7
        %v359 = vsub.s32 4, %v358
        %v360 = vrot.slane %v330, %v359
        %v361 = vmul.f32 %v355, %v360
        %v362 = vmul.f32 %v356, %v360
        %v363 = vmax.f32 %v361, 0.0
        %v364 = vmax.f32 %v362, 0.0
        %v365 = vmin.f32 %v363, 1.0
        %v366 = vmin.f32 %v364, 1.0
        %v367 = vmul.f32 %v346, %v365
        %v368 = vmul.f32 %v346, %v366
        %v369 = vsub.f32 %v335, %v367
        %v370 = vsub.f32 %v336, %v368
        %v371 = vmul.f32 %v352, %v365
        %v372 = vmul.f32 %v352, %v366
        %v373 = vsub.f32 %v341, %v371
        %v374 = vsub.f32 %v342, %v372
        %v375 = vmul.f32 %v369, %v369
        %v376 = vmul.f32 %v370, %v370
        %v377 = vmul.f32 %v373, %v373
        %v378 = vmul.f32 %v374, %v374
        %v379 = vadd.f32 %v375, %v377
        %v380 = vadd.f32 %v376, %v378
        %382 = vset.pattern.permute.xlu0 0
        %383 = vperm.xlu0 %382, %v326
        %v384 = vpop.permute.xlu0 %383
        %387 = vset.pattern.permute.xlu0 0
        %388 = vperm.xlu0 %387, %v327
        %v389 = vpop.permute.xlu0 %388
        %v391 = vmul.f32 %v384, %v341
        %v392 = vmul.f32 %v389, %v342
        %394 = vset.pattern.permute.xlu0 1
        %395 = vperm.xlu0 %394, %v328
        %v396 = vpop.permute.xlu0 %395
        %399 = vset.pattern.permute.xlu0 1
        %400 = vperm.xlu0 %399, %v329
        %v401 = vpop.permute.xlu0 %400
        %v403 = vmul.f32 %v396, %v335
        %v404 = vmul.f32 %v401, %v336
        %v405 = vsub.f32 %v391, %v403
        %v406 = vsub.f32 %v392, %v404
        %v407 = vmul.f32 %v346, %v341
        %v408 = vmul.f32 %v346, %v342
        %v409 = vmul.f32 %v352, %v335
        %v410 = vmul.f32 %v352, %v336
        %v411 = vsub.f32 %v407, %v409
        %v412 = vsub.f32 %v408, %v410
        %v413 = vmul.f32 %v384, %v352
        %v414 = vmul.f32 %v389, %v352
        %v415 = vmul.f32 %v396, %v346
        %v416 = vmul.f32 %v401, %v346
        %v417 = vsub.f32 %v413, %v415
        %v418 = vsub.f32 %v414, %v416
        %v419 = vadd.f32 %v417, 1e-06
        %v420 = vadd.f32 %v418, 1e-06
        %v421 = vand.u32 2147483647, %v419
        %v422 = vand.u32 2147483647, %v420
        %v423 = vmul.f32 %v405, %v419
        %v424 = vmul.f32 %v406, %v420
        %vm425 = vcmp.ge.f32.partialorder %v423, 0.0
        %vm426 = vcmp.ge.f32.partialorder %v424, 0.0
        %v427 = vand.u32 2147483647, %v405
        %v428 = vand.u32 2147483647, %v406
        %vm429 = vcmp.le.f32.partialorder %v427, %v421
        %vm430 = vcmp.le.f32.partialorder %v428, %v422
        %vm431 = vmand %vm425, %vm429
        %vm432 = vmand %vm426, %vm430
        %v433 = vmul.f32 %v411, %v419
        %v434 = vmul.f32 %v412, %v420
        %vm435 = vcmp.ge.f32.partialorder %v433, 0.0
        %vm436 = vcmp.ge.f32.partialorder %v434, 0.0
        %vm437 = vmand %vm431, %vm435
        %vm438 = vmand %vm432, %vm436
        %v439 = vand.u32 2147483647, %v411
        %v440 = vand.u32 2147483647, %v412
        %vm441 = vcmp.le.f32.partialorder %v439, %v421
        %vm442 = vcmp.le.f32.partialorder %v440, %v422
        %vm443 = vmand %vm437, %vm441
        %vm444 = vmand %vm438, %vm442
        %v445 = vsel %vm443, 1.0, 0.0
        %v446 = vsel %vm444, 1.0, 0.0
        %447 = vmin.xlane.f32.xlu0 %v379
        %v448 = vpop.xlane.xlu0 %447
        %449 = vmin.xlane.f32.xlu0 %v380
        %v450 = vpop.xlane.xlu0 %449
        %v451 = vrsqrt.pop %v448
        %v452 = vmul.f32 %v448, %v451
        %vm453 = vcmp.eq.f32.partialorder %v448, inf
        %v454 = vsel %vm453, %v448, %v452
        %vm455 = vcmp.eq.f32.partialorder %v448, 0.0
        %v456 = vand.u32 %v448, 2147483648
        %v457 = vsel %vm455, %v456, %v454
        %v458 = vrsqrt.pop %v450
        %v459 = vmul.f32 %v450, %v458
        %vm460 = vcmp.eq.f32.partialorder %v450, inf
        %v461 = vsel %vm460, %v450, %v459
        %vm462 = vcmp.eq.f32.partialorder %v450, 0.0
        %v463 = vand.u32 %v450, 2147483648
        %v464 = vsel %vm462, %v463, %v461
        %465 = vmax.xlane.f32.xlu0 %v445
        %v466 = vpop.xlane.xlu0 %465
        %467 = vmax.xlane.f32.xlu0 %v446
        %v468 = vpop.xlane.xlu0 %467
        %vm469 = vcmp.gt.f32.partialorder %v466, 0.0
        %vm470 = vcmp.gt.f32.partialorder %v468, 0.0
        %v471 = vsub.f32 0.0, %v457
        %v472 = vsub.f32 0.0, %v464
        %v473 = vsel %vm469, %v457, %v471
        %v474 = vsel %vm470, %v464, %v472
        %v475 = vadd.f32 %v473, 0.5
        %v476 = vadd.f32 %v474, 0.5
        %v477 = vmax.f32 %v475, 0.0
        %v478 = vmax.f32 %v476, 0.0
        %s479 = scalar_lea.vmem %s242, %s253
        %vm480 = vcmask 7168
        %481 = vst.msk [vmem:[%s479] sm:$0xff] %vm480, %v477
        %482 = vst.msk [vmem:[%s479 + $0x8] sm:$0xff] %vm480, %v478
      $region37: #{tpu_custom_call.1} parent=31 // loop_footer
        %s252 = sadd.s32 1, %s248
      $region38: #{tpu_custom_call.1} parent=31 // loop_footer_branch
        %247 = sbr.rel target = $region34
      $region39: #{tpu_custom_call.1} parent=31 // loop_exit
        _
      %s483 = smul.u32 4, %s19
      %p484 = scmp.lt.s32.totalorder %s18, 1
      %s485 = scalar_select %p484, %s18, 1
      %p486 = scmp.lt.s32.totalorder %s483, 3
      %s487 = scalar_select %p486, %s483, 3
      %s488 = smul.addr %s485, 4
      %s489 = sadd.s32 %s487, %s488
      %s490 = smul.addr %s489, 8
      %s491 = scalar_lea.vmem %s3, %s490
      // Predicated region
      $region40: #{tpu_custom_call.1} parent=31 // pred_check
        %p492 = pneg %p126
      $region41: #{tpu_custom_call.1} parent=31 // pred_check_branch
        %494 = sbr.rel (%p492) target = $region43
      $region42: #{tpu_custom_call.1} parent=31 // pred_region
        %s495 = smul.u32 4, %s19
      $region43: #{tpu_custom_call.1} parent=31 // pred_fallthru
        _
    $region32: #{tpu_custom_call.1} parent=5 // pred_fallthru
      _
    %p496 = scmp.le.s32.totalorder 2, %s9
    // Predicated region
    $region44: #{tpu_custom_call.1} parent=5 // pred_check
      %p497 = pneg %p496
    $region45: #{tpu_custom_call.1} parent=5 // pred_check_branch
      %499 = sbr.rel (%p497) target = $region47
    $region46: #{tpu_custom_call.1} parent=5 // pred_region
      %s500 = ssub.s32 %s9, 2
      // Predicated region
      $region48: #{tpu_custom_call.1} parent=46 // pred_check
        %p501 = pneg %p132
      $region49: #{tpu_custom_call.1} parent=46 // pred_check_branch
        %503 = sbr.rel (%p501) target = $region51
      $region50: #{tpu_custom_call.1} parent=46 // pred_region
        %s504 = smul.u32 4, %s21
        %p505 = scmp.lt.s32.totalorder %s20, 1
        %s506 = scalar_select %p505, %s20, 1
        %p507 = scmp.lt.s32.totalorder %s504, 3
        %s508 = scalar_select %p507, %s504, 3
        %s509 = smul.addr %s506, 4
        %s510 = sadd.s32 %s508, %s509
        %s511 = smul.addr %s510, 8
        %s512 = scalar_lea.vmem %s3, %s511
      $region51: #{tpu_custom_call.1} parent=46 // pred_fallthru
        _
    $region47: #{tpu_custom_call.1} parent=5 // pred_fallthru
      _
  $region6: #{tpu_custom_call.1} parent=0 // loop_footer
    %s13 = sadd.s32 1, %s9
  $region7: #{tpu_custom_call.1} parent=0 // loop_footer_branch
    %8 = sbr.rel target = $region3
  $region8: #{tpu_custom_call.1} parent=0 // loop_exit
    _

</llo_original>
